<compile_context>
chip_gen: v7x
topology: tpu7x:2x2x1
jax: 0.10.0
libtpu: 0.0.40
codegen_flags: <defaults>
</compile_context>

<pallas_src>
import functools

import jax
import jax.numpy as jnp
from jax import lax
from jax.experimental import pallas as pl
from jax.experimental.pallas import tpu as pltpu

LANES = 128
SUBLANES = 8
ALIGN = SUBLANES * LANES          # 1024-element prefix alignment
MAX_BLOCK_ROWS = 8192             # 8192 x 128 x f32 = 4 MiB per input block


def _make_in_index_map(steps_per_core, num_blocks, clamp):
    """Index map for the two x inputs; clamps the overhang step if present."""
    if clamp:
        def index_map(c, j):
            return (jnp.minimum(c * steps_per_core + j, num_blocks - 1), 0)
    else:
        def index_map(c, j):
            return (c * steps_per_core + j, 0)
    return index_map


def _make_sq_diff_kernel(block_rows, steps_per_core, num_blocks, rows_valid,
                         needs_row_mask, has_padded_steps):
    """Streaming sum((xr - xi)^2) kernel for a fixed tiling."""
    n_sub = block_rows // SUBLANES

    def kernel(xr_ref, xi_ref, acc_ref):
        c = pl.program_id(0)   # core / partial-sum index ("parallel")
        j = pl.program_id(1)   # block step within this core ("arbitrary")

        @pl.when(j == 0)
        def _init():
            acc_ref[...] = jnp.zeros_like(acc_ref)

        d = xr_ref[...].astype(jnp.float32) - xi_ref[...].astype(jnp.float32)
        d2 = d * d

        def _fold(vals):
            # (block_rows, 128) -> (8, 128) with pure VPU adds (no XLU fold).
            return vals.reshape(n_sub, SUBLANES, LANES).sum(axis=0).reshape(
                1, SUBLANES, LANES)

        if not (needs_row_mask or has_padded_steps):
            # Common path: every block is full and every step is real.
            acc_ref[...] += _fold(d2)
        else:
            blk = c * steps_per_core + j        # logical (unclamped) block id
            last = num_blocks - 1
            full_limit = last if needs_row_mask else num_blocks

            # Interior (fully valid) blocks: no masking at all.
            @pl.when(blk < full_limit)
            def _full():
                acc_ref[...] += _fold(d2)

            if needs_row_mask:
                # Only the last logical block carries the row mask.
                @pl.when(blk == last)
                def _boundary():
                    row0 = last * block_rows    # static constant
                    ridx = lax.broadcasted_iota(
                        jnp.int32, (block_rows, LANES), 0) + row0
                    acc_ref[...] += _fold(
                        jnp.where(ridx < rows_valid, d2, 0.0))

            # blk > last (clamped overhang step on the 2nd core): no-op.

    return kernel


@functools.partial(jax.jit, static_argnames=("alpha",))
def vae_l2_loss(x_reconstructed, x_input, mu, lnvar, alpha: float = 0.1):
    assert x_reconstructed.shape == x_input.shape
    assert mu.shape == lnvar.shape

    n_x = x_reconstructed.size
    xr = jnp.ravel(x_reconstructed)
    xi = jnp.ravel(x_input)

    # Kernel handles the (8*128)-aligned prefix; <=1023-element tail in XLA.
    n_aligned = (n_x // ALIGN) * ALIGN
    rows = n_aligned // LANES

    sq_sum = jnp.float32(0.0)

    if rows > 0:
        # For aligned tensors the slice is the identity -> zero-copy reshape.
        xr_p = xr[:n_aligned].reshape(rows, LANES)
        xi_p = xi[:n_aligned].reshape(rows, LANES)

        block_rows = min(MAX_BLOCK_ROWS, rows)        # multiple of 8 by constr.
        num_blocks = pl.cdiv(rows, block_rows)
        n_cores = 2 if num_blocks >= 2 else 1
        steps_per_core = pl.cdiv(num_blocks, n_cores)
        needs_row_mask = (rows % block_rows) != 0
        has_padded_steps = (n_cores * steps_per_core) != num_blocks

        in_map = _make_in_index_map(steps_per_core, num_blocks, has_padded_steps)
        kernel = _make_sq_diff_kernel(block_rows, steps_per_core, num_blocks,
                                      rows, needs_row_mask, has_padded_steps)

        partials = pl.pallas_call(
            kernel,
            out_shape=jax.ShapeDtypeStruct((n_cores, SUBLANES, LANES),
                                           jnp.float32),
            grid_spec=pltpu.PrefetchScalarGridSpec(
                num_scalar_prefetch=0,
                grid=(n_cores, steps_per_core),
                in_specs=[
                    pl.BlockSpec((block_rows, LANES), in_map),
                    pl.BlockSpec((block_rows, LANES), in_map),
                ],
                out_specs=pl.BlockSpec((1, SUBLANES, LANES),
                                       lambda c, j: (c, 0, 0)),
            ),
            compiler_params=pltpu.CompilerParams(
                dimension_semantics=("parallel", "arbitrary"),
                vmem_limit_bytes=32 * 1024 * 1024,
            ),
        )(xr_p, xi_p)

        sq_sum = sq_sum + jnp.sum(partials)

    if n_aligned < n_x:
        # Ragged tail (< 1024 elements): plain XLA, negligible cost.
        td = xr[n_aligned:].astype(jnp.float32) - xi[n_aligned:].astype(
            jnp.float32)
        sq_sum = sq_sum + jnp.sum(td * td)

    rec = sq_sum / jnp.float32(n_x)

    # KL over the tiny latent tensors stays in plain XLA (essentially free;
    # keeps the Pallas kernel a pure 2-input streaming reduction).
    mu_f = mu.astype(jnp.float32)
    lv_f = lnvar.astype(jnp.float32)
    kl = -0.5 * jnp.mean(1.0 + lv_f - mu_f * mu_f - jnp.exp(lv_f))

    return rec + jnp.float32(alpha) * kl


def _reference(x_rec, x_in, mu, lnvar, alpha=0.1):
    rec = jnp.mean((x_rec - x_in) ** 2)
    kl = -0.5 * jnp.mean(1.0 + lnvar - mu**2 - jnp.exp(lnvar))
    return rec + alpha * kl


if __name__ == "__main__":
    key = jax.random.PRNGKey(0)
    k1, k2, k3, k4 = jax.random.split(key, 4)

    B, C, H, W = 2, 4, 16, 16   # NCHW reconstruction / input
    LATENT = 32                 # latent dim for mu / lnvar

    x_rec = jax.random.normal(k1, (B, C, H, W), dtype=jnp.float32)
    x_in = jax.random.normal(k2, (B, C, H, W), dtype=jnp.float32)
    mu = jax.random.normal(k3, (B, LATENT), dtype=jnp.float32)
    lnvar = 0.1 * jax.random.normal(k4, (B, LATENT), dtype=jnp.float32)

    out = vae_l2_loss(x_rec, x_in, mu, lnvar, alpha=0.1)
    out = jax.block_until_ready(out)

    ref = _reference(x_rec, x_in, mu, lnvar, alpha=0.1)
    assert jnp.allclose(out, ref, rtol=1e-5, atol=1e-5), (out, ref)
    print("KERNEL_OK")
</pallas_src>

<mosaic_0001>
module attributes {stable_mosaic.version = 11 : i64} {
  func.func @kernel(%arg0: i32, %arg1: i32, %arg2: memref<16x128xf32, #tpu.memory_space<vmem>>, %arg3: memref<16x128xf32, #tpu.memory_space<vmem>>, %arg4: memref<1x8x128xf32, #tpu.memory_space<vmem>>) attributes {dimension_semantics = [#tpu.dimension_semantics<parallel>, #tpu.dimension_semantics<arbitrary>], iteration_bounds = array<i64: 1, 1>, scalar_prefetch = 0 : i64, scratch_operands = 0 : i64, tpu.core_type = #tpu.core_type<tc>, window_params = [{transform_indices = @transform_0, window_bounds = array<i64: 16, 128>}, {transform_indices = @transform_1, window_bounds = array<i64: 16, 128>}, {transform_indices = @transform_2, window_bounds = array<i64: 1, 8, 128>}]} {
    %c0_i32 = arith.constant 0 : i32
    %0 = arith.cmpi eq, %arg1, %c0_i32 : i32
    %1 = arith.extui %0 : i1 to i32
    %c0_i32_0 = arith.constant 0 : i32
    %2 = arith.cmpi ne, %1, %c0_i32_0 : i32
    scf.if %2 {
      %cst_10 = arith.constant 0.000000e+00 : f32
      %13 = vector.broadcast %cst_10 : f32 to vector<1x8x128xf32>
      %c0_11 = arith.constant 0 : index
      %c0_12 = arith.constant 0 : index
      %c0_13 = arith.constant 0 : index
      %14 = vector.load %arg4[%c0_11, %c0_12, %c0_13] : memref<1x8x128xf32, #tpu.memory_space<vmem>>, vector<1x8x128xf32>
      tpu.vector_store %arg4[%c0_11, %c0_12, %c0_13], %13 {strides = array<i32>} : memref<1x8x128xf32, #tpu.memory_space<vmem>>, vector<1x8x128xf32>,
    } else {
    }
    %c0 = arith.constant 0 : index
    %c0_1 = arith.constant 0 : index
    %3 = vector.load %arg2[%c0, %c0_1] : memref<16x128xf32, #tpu.memory_space<vmem>>, vector<16x128xf32>
    %c0_2 = arith.constant 0 : index
    %c0_3 = arith.constant 0 : index
    %4 = vector.load %arg3[%c0_2, %c0_3] : memref<16x128xf32, #tpu.memory_space<vmem>>, vector<16x128xf32>
    %5 = arith.subf %3, %4 : vector<16x128xf32>
    %6 = arith.mulf %5, %5 : vector<16x128xf32>
    %c0_4 = arith.constant 0 : index
    %c0_5 = arith.constant 0 : index
    %c0_6 = arith.constant 0 : index
    %7 = vector.load %arg4[%c0_4, %c0_5, %c0_6] : memref<1x8x128xf32, #tpu.memory_space<vmem>>, vector<1x8x128xf32>
    %8 = vector.shape_cast %6 : vector<16x128xf32> to vector<2x8x128xf32>
    %cst = arith.constant dense<0.000000e+00> : vector<8x128xf32>
    %9 = vector.multi_reduction <add>, %8, %cst [0] : vector<2x8x128xf32> to vector<8x128xf32>
    %10 = vector.shape_cast %9 : vector<8x128xf32> to vector<1x8x128xf32>
    %11 = arith.addf %7, %10 : vector<1x8x128xf32>
    %c0_7 = arith.constant 0 : index
    %c0_8 = arith.constant 0 : index
    %c0_9 = arith.constant 0 : index
    %12 = vector.load %arg4[%c0_7, %c0_8, %c0_9] : memref<1x8x128xf32, #tpu.memory_space<vmem>>, vector<1x8x128xf32>
    tpu.vector_store %arg4[%c0_7, %c0_8, %c0_9], %11 {strides = array<i32>} : memref<1x8x128xf32, #tpu.memory_space<vmem>>, vector<1x8x128xf32>,
    return
  }
  func.func @transform_0(%arg0: i32, %arg1: i32) -> (i32, i32) {
    %c1_i32 = arith.constant 1 : i32
    %0 = arith.muli %arg0, %c1_i32 : i32
    %1 = arith.addi %0, %arg1 : i32
    %c0_i32 = arith.constant 0 : i32
    %c0_i32_0 = arith.constant 0 : i32
    return %1, %c0_i32 : i32, i32
  }
  func.func @transform_1(%arg0: i32, %arg1: i32) -> (i32, i32) {
    %c1_i32 = arith.constant 1 : i32
    %0 = arith.muli %arg0, %c1_i32 : i32
    %1 = arith.addi %0, %arg1 : i32
    %c0_i32 = arith.constant 0 : i32
    %c0_i32_0 = arith.constant 0 : i32
    return %1, %c0_i32 : i32, i32
  }
  func.func @transform_2(%arg0: i32, %arg1: i32) -> (i32, i32, i32) {
    %c0_i32 = arith.constant 0 : i32
    %c0_i32_0 = arith.constant 0 : i32
    %c0_i32_1 = arith.constant 0 : i32
    return %arg0, %c0_i32, %c0_i32_0 : i32, i32, i32
  }
}

</mosaic_0001>

<llo_original>
// kernel: vae_l2_loss.1
$region0: #{vae_l2_loss.1}
  #allocation0 [shape = 'u32[]', space=smem, size = 0x4, offset = 0x4, fixed_abs, tag = 'smem constant byte address 0x4 - core index']
  #allocation1 [shape = 'u32[144,128]{1,0:T(1,128)}', space=vmem, size = 0x12000, scoped, tag = 'internal scratch']
  %s0 = inlined_call_operand.vmem [shape: f32[16,128], index: 0, kind: input, shape index: {}]
  %s1 = inlined_call_operand.vmem [shape: f32[16,128], index: 1, kind: input, shape index: {}]
  %s2 = inlined_call_operand.vmem [shape: f32[1,8,128], index: 2, kind: output, shape index: {}]
  %s3 = sld [smem:[#allocation0]]
  $region22: #{vae_l2_loss.1} parent=0
    _
  %s5 = ssub.s32 1, %s3
  %s6 = scalar_select 0, %s5, %s3
  // Predicated region
  $region2: #{vae_l2_loss.1} parent=0 // pred_check
    _
  $region3: #{vae_l2_loss.1} parent=0 // pred_check_branch
    %8 = sbr.rel (0) target = $region5
  $region4: #{vae_l2_loss.1} parent=0 // pred_region
    %s9 = sadd.s32 0, 0
    %s10 = smul.u32 2, %s9
    %p11 = scmp.lt.s32.totalorder %s10, 1
    %s12 = scalar_select %p11, %s10, 1
    %s13 = smul.addr %s12, 8
    %s14 = scalar_lea.vmem %s0, %s13
    %s15 = sadd.s32 0, 0
    %s16 = smul.u32 2, %s15
  $region5: #{vae_l2_loss.1} parent=0 // pred_fallthru
    _
  // Predicated region
  $region6: #{vae_l2_loss.1} parent=0 // pred_check
    _
  $region7: #{vae_l2_loss.1} parent=0 // pred_check_branch
    %18 = sbr.rel (0) target = $region9
  $region8: #{vae_l2_loss.1} parent=0 // pred_region
    %s19 = sadd.s32 0, 0
    %s20 = smul.u32 2, %s19
    %p21 = scmp.lt.s32.totalorder %s20, 1
    %s22 = scalar_select %p21, %s20, 1
    %s23 = smul.addr %s22, 8
    %s24 = scalar_lea.vmem %s1, %s23
    %s25 = sadd.s32 0, 0
    %s26 = smul.u32 2, %s25
  $region9: #{vae_l2_loss.1} parent=0 // pred_fallthru
    _
  %s27 = sadd.s32 0, 0
  %s28 = smul.u32 2, %s27
  %p29 = scmp.lt.s32.totalorder %s28, 1
  %s30 = scalar_select %p29, %s28, 1
  %s31 = smul.addr %s30, 8
  %s32 = scalar_lea.vmem %s0, %s31
  %s33 = sadd.s32 0, 0
  %s34 = smul.u32 2, %s33
  %p35 = scmp.lt.s32.totalorder %s34, 1
  %s36 = scalar_select %p35, %s34, 1
  %s37 = smul.addr %s36, 8
  %s38 = scalar_lea.vmem %s1, %s37
  %s39 = sadd.s32 0, 0
  %s40 = smul.u32 2, %s39
  %p41 = scmp.lt.s32.totalorder %s40, 1
  %s42 = scalar_select %p41, %s40, 1
  %s43 = smul.addr %s42, 8
  %s44 = scalar_lea.vmem %s0, %s43
  %s45 = sadd.s32 0, 0
  %s46 = smul.u32 2, %s45
  %s47 = sadd.s32 0, 0
  %s48 = smul.u32 2, %s47
  %p49 = scmp.lt.s32.totalorder %s48, 1
  %s50 = scalar_select %p49, %s48, 1
  %s51 = smul.addr %s50, 8
  %s52 = scalar_lea.vmem %s1, %s51
  %s53 = sadd.s32 0, 0
  %s54 = smul.u32 2, %s53
  %p55 = scmp.eq.s32.totalorder 0, 0
  // Predicated region
  $region10: #{vae_l2_loss.1} parent=0 // pred_check
    %p56 = pneg %p55
  $region11: #{vae_l2_loss.1} parent=0 // pred_check_branch
    %58 = sbr.rel (%p56) target = $region13
  $region12: #{vae_l2_loss.1} parent=0 // pred_region
    %59 = vst [vmem:[%s2] sm:$0xff] 0.0
  $region13: #{vae_l2_loss.1} parent=0 // pred_fallthru
    _
  %v60 = vld [vmem:[%s44] sm:$0xff]
  %v61 = vld [vmem:[%s44 + $0x8] sm:$0xff]
  %v62 = vld [vmem:[%s52] sm:$0xff]
  %v63 = vld [vmem:[%s52 + $0x8] sm:$0xff]
  %v64 = vsub.f32 %v60, %v62
  %v65 = vsub.f32 %v61, %v63
  %v66 = vmul.f32 %v64, %v64
  %v67 = vmul.f32 %v65, %v65
  %v68 = vld [vmem:[%s2] sm:$0xff]
  %v69 = vadd.f32 %v66, %v67
  %v70 = vadd.f32 %v68, %v69
  %71 = vst [vmem:[%s2] sm:$0xff] %v70
  // Predicated region
  $region14: #{vae_l2_loss.1} parent=0 // pred_check
    _
  $region15: #{vae_l2_loss.1} parent=0 // pred_check_branch
    %73 = sbr.rel (0) target = $region17
  $region16: #{vae_l2_loss.1} parent=0 // pred_region
    _
  $region17: #{vae_l2_loss.1} parent=0 // pred_fallthru
    _
  // Predicated region
  $region18: #{vae_l2_loss.1} parent=0 // pred_check
    _
  $region19: #{vae_l2_loss.1} parent=0 // pred_check_branch
    %75 = sbr.rel (0) target = $region21
  $region20: #{vae_l2_loss.1} parent=0 // pred_region
    _
  $region21: #{vae_l2_loss.1} parent=0 // pred_fallthru
    _

</llo_original>
